<compile_context>
chip_gen: v7x
topology: tpu7x:2x2x1
jax: 0.10.0
libtpu: 0.0.40
codegen_flags: <defaults>
</compile_context>

<pallas_src>
import functools

import jax
import jax.numpy as jnp
from jax.experimental import pallas as pl
from jax.experimental.pallas import tpu as pltpu


def _mlp_kernel(x_ref, w_in_ref, b_in_ref, w_hid_ref, b_hid_ref,
                w_out_ref, b_out_ref, o_ref, *, num_hidden):
    """One row-tile of the fused MLP.  Weights are folded (block-diagonal)
    and resident in VMEM; activations stay in registers across layers."""
    cdt = w_in_ref.dtype  # MXU input dtype (f32, or bf16 on v6e/v7x path)

    h = jnp.dot(x_ref[...].astype(cdt), w_in_ref[...],
                preferred_element_type=jnp.float32)
    h = jnp.maximum(h + b_in_ref[...], 0.0)                      # relu (f32, VPU)

    for l in range(num_hidden):                                  # static unroll
        h = jnp.dot(h.astype(cdt), w_hid_ref[l],
                    preferred_element_type=jnp.float32)
        h = jnp.maximum(h + b_hid_ref[l], 0.0)

    out = jnp.dot(h.astype(cdt), w_out_ref[...],
                  preferred_element_type=jnp.float32)
    out = jnp.tanh(out + b_out_ref[...])                         # tanh -> EUP
    o_ref[...] = out.astype(o_ref.dtype)                         # lane-dense vst


def fold_params(params, hidden_channels, num_hidden_layers, n_rows,
                mxu_dtype=jnp.float32):
    """One-time weight preprocessing: fold F = 128//HC feature groups into a
    single 128-lane row by turning each (in, out) weight into a block-diagonal
    (F*in, F*out) matrix and tiling biases F times.  Falls back to F=1 when
    the shapes don't fold cleanly."""
    HC = hidden_channels
    HH = params["w_in"].shape[1]
    n_hid = max(num_hidden_layers - 1, 0)

    if 128 % HC == 0 and n_rows % (128 // HC) == 0:
        F = 128 // HC
    else:
        F = 1  # un-folded fallback (block last dim == full array dim)

    eye = jnp.eye(F, dtype=jnp.float32)

    def bd(w):   # (din, dout) -> block-diagonal (F*din, F*dout), MXU dtype
        return jnp.kron(eye, w.astype(jnp.float32)).astype(mxu_dtype)

    def tb(b):   # (1, dout) -> (1, F*dout), biases stay f32
        return jnp.tile(b.astype(jnp.float32), (1, F))

    if n_hid > 0:
        w_hid = params["w_hid"][:n_hid]
        b_hid = params["b_hid"][:n_hid]
    else:        # unused placeholders (kernel's static loop never touches them)
        w_hid = jnp.zeros((1, HH, HH), jnp.float32)
        b_hid = jnp.zeros((1, 1, HH), jnp.float32)

    return {
        "fold": F,
        "hidden_channels": HC,
        "num_hidden": n_hid,
        "w_in": bd(params["w_in"]),                                   # (F*HC, F*HH)
        "b_in": tb(params["b_in"]),                                   # (1, F*HH)
        "w_hid": jnp.stack([bd(w_hid[l]) for l in range(w_hid.shape[0])]),
        "b_hid": jnp.stack([tb(b_hid[l]) for l in range(b_hid.shape[0])]),
        "w_out": bd(params["w_out"]),                                 # (F*HH, F*HC)
        "b_out": tb(params["b_out"]),                                 # (1, F*HC)
    }


def g_func_linear_forward(z, folded, *, tile_rows=128):
    """z: (B, D) with D % hidden_channels == 0.  Returns tanh(MLP(z)), (B, D).

    tile_rows counts *folded* rows (each = F original rows); the default 128
    folded rows == 512 original rows keeps the intermediate activation tile
    inside the vreg file on v5e/v6e/v7x while filling the MXU sublanes.
    """
    B, D = z.shape
    HC = folded["hidden_channels"]
    F = folded["fold"]
    n_hid = folded["num_hidden"]
    assert D % HC == 0
    M = B * (D // HC)                 # conceptual rows of the (M, HC) matrix
    assert M % F == 0
    FHC = F * HC                      # folded (lane-dense) feature width
    M2 = M // F                       # folded row count

    # Row-major bit-identical reshape -> (M2, FHC); no data movement.
    x2 = z.reshape(M2, FHC)

    if M2 <= tile_rows:
        tr = M2                       # single block spanning full row extent
    else:
        tr = max(8, (tile_rows // 8) * 8)
    grid = (pl.cdiv(M2, tr),)         # no wrapper pad; ragged last tile is
                                      # masked by Pallas (rows are independent)

    kernel = functools.partial(_mlp_kernel, num_hidden=n_hid)

    out2 = pl.pallas_call(
        kernel,
        out_shape=jax.ShapeDtypeStruct((M2, FHC), z.dtype),
        grid=grid,
        in_specs=[
            pl.BlockSpec((tr, FHC), lambda i: (i, 0)),                 # z rows
            pl.BlockSpec(folded["w_in"].shape, lambda i: (0, 0)),      # resident
            pl.BlockSpec(folded["b_in"].shape, lambda i: (0, 0)),
            pl.BlockSpec(folded["w_hid"].shape, lambda i: (0, 0, 0)),
            pl.BlockSpec(folded["b_hid"].shape, lambda i: (0, 0, 0)),
            pl.BlockSpec(folded["w_out"].shape, lambda i: (0, 0)),
            pl.BlockSpec(folded["b_out"].shape, lambda i: (0, 0)),
        ],
        out_specs=pl.BlockSpec((tr, FHC), lambda i: (i, 0)),           # lane-dense
        compiler_params=pltpu.CompilerParams(
            dimension_semantics=("parallel",)),
    )(x2, folded["w_in"], folded["b_in"], folded["w_hid"],
      folded["b_hid"], folded["w_out"], folded["b_out"])

    return out2.reshape(B, D)


def init_params(key, hidden_channels, hidden_hidden_channels,
                num_hidden_layers, dtype=jnp.float32):
    """Synthetic params; torch nn.Linear weights transposed to (in, out)."""
    HC, HH, L = hidden_channels, hidden_hidden_channels, num_hidden_layers
    keys = jax.random.split(key, 6)
    n_hid = max(L - 1, 1)
    params = {
        "w_in": jax.random.normal(keys[0], (HC, HH), dtype) * 0.1,
        "b_in": jax.random.normal(keys[1], (1, HH), dtype) * 0.1,
        "w_hid": jax.random.normal(keys[2], (n_hid, HH, HH), dtype) * 0.1,
        "b_hid": jax.random.normal(keys[3], (n_hid, 1, HH), dtype) * 0.1,
        "w_out": jax.random.normal(keys[4], (HH, HC), dtype) * 0.1,
        "b_out": jax.random.normal(keys[5], (1, HC), dtype) * 0.1,
    }
    if L - 1 == 0:
        params["w_hid"] = jnp.zeros((1, HH, HH), dtype)
        params["b_hid"] = jnp.zeros((1, 1, HH), dtype)
    return params


def reference_forward(z, params, hidden_channels, num_hidden_layers):
    B, D = z.shape
    x = z.reshape(B, D // hidden_channels, hidden_channels)
    h = jnp.maximum(x @ params["w_in"] + params["b_in"], 0.0)
    for l in range(num_hidden_layers - 1):
        h = jnp.maximum(h @ params["w_hid"][l] + params["b_hid"][l], 0.0)
    out = h @ params["w_out"] + params["b_out"]
    return jnp.tanh(out.reshape(B, -1))


if __name__ == "__main__":
    key = jax.random.PRNGKey(0)
    k_z, k_p = jax.random.split(key)

    # Module config: hidden_channels=32, hidden_hidden_channels=64,
    # num_hidden_layers=3 (=> 2 hidden HH->HH linears). t is unused by forward.
    hidden_channels = 32
    hidden_hidden_channels = 64
    num_hidden_layers = 3

    B, N = 2, 16                       # z: (B, N*hidden_channels) = (2, 512)
    z = jax.random.normal(k_z, (B, N * hidden_channels), jnp.float32)

    params = init_params(k_p, hidden_channels, hidden_hidden_channels,
                         num_hidden_layers)
    M = B * N

    ref = reference_forward(z, params, hidden_channels, num_hidden_layers)

    # f32 MXU path (default): tight correctness check.
    folded_f32 = fold_params(params, hidden_channels, num_hidden_layers, M)
    out = jax.block_until_ready(g_func_linear_forward(z, folded_f32))
    assert out.shape == (B, N * hidden_channels)
    assert jnp.allclose(out, ref, atol=1e-4, rtol=1e-4)

    # bf16-MXU path (v6e/v7x fast path): bf16 matmul inputs, f32 accumulation.
    folded_bf16 = fold_params(params, hidden_channels, num_hidden_layers, M,
                              mxu_dtype=jnp.bfloat16)
    out_bf16 = jax.block_until_ready(g_func_linear_forward(z, folded_bf16))
    assert jnp.allclose(out_bf16, ref, atol=5e-2, rtol=5e-2)

    print("KERNEL_OK")
</pallas_src>

<mosaic_0001>
module attributes {stable_mosaic.version = 11 : i64} {
  func.func @_mlp_kernel(%arg0: i32, %arg1: memref<8x128xf32, #tpu.memory_space<vmem>>, %arg2: memref<128x256xf32, #tpu.memory_space<vmem>>, %arg3: memref<1x256xf32, #tpu.memory_space<vmem>>, %arg4: memref<2x256x256xf32, #tpu.memory_space<vmem>>, %arg5: memref<2x1x256xf32, #tpu.memory_space<vmem>>, %arg6: memref<256x128xf32, #tpu.memory_space<vmem>>, %arg7: memref<1x128xf32, #tpu.memory_space<vmem>>, %arg8: memref<8x128xf32, #tpu.memory_space<vmem>>) attributes {dimension_semantics = [#tpu.dimension_semantics<parallel>], iteration_bounds = array<i64: 1>, scalar_prefetch = 0 : i64, scratch_operands = 0 : i64, tpu.core_type = #tpu.core_type<tc>, window_params = [{transform_indices = @transform_0, window_bounds = array<i64: 8, 128>}, {pipeline_mode = #tpu.pipeline_mode<synchronous>, transform_indices = @transform_1, window_bounds = array<i64: 128, 256>}, {pipeline_mode = #tpu.pipeline_mode<synchronous>, transform_indices = @transform_2, window_bounds = array<i64: 1, 256>}, {pipeline_mode = #tpu.pipeline_mode<synchronous>, transform_indices = @transform_3, window_bounds = array<i64: 2, 256, 256>}, {pipeline_mode = #tpu.pipeline_mode<synchronous>, transform_indices = @transform_4, window_bounds = array<i64: 2, 1, 256>}, {pipeline_mode = #tpu.pipeline_mode<synchronous>, transform_indices = @transform_5, window_bounds = array<i64: 256, 128>}, {pipeline_mode = #tpu.pipeline_mode<synchronous>, transform_indices = @transform_6, window_bounds = array<i64: 1, 128>}, {transform_indices = @transform_7, window_bounds = array<i64: 8, 128>}]} {
    %c0 = arith.constant 0 : index
    %c0_0 = arith.constant 0 : index
    %0 = vector.load %arg1[%c0, %c0_0] : memref<8x128xf32, #tpu.memory_space<vmem>>, vector<8x128xf32>
    %c0_1 = arith.constant 0 : index
    %c0_2 = arith.constant 0 : index
    %1 = vector.load %arg2[%c0_1, %c0_2] : memref<128x256xf32, #tpu.memory_space<vmem>>, vector<128x256xf32>
    %cst = arith.constant dense<0.000000e+00> : vector<8x256xf32>
    %2 = tpu.matmul %0, %1, %cst {dimension_numbers = #tpu.dot_dimension_numbers<[1], [0], [0], [1], [0, 0, 1, 1], [], []>} : vector<8x128xf32>, vector<128x256xf32>, vector<8x256xf32> -> vector<8x256xf32>
    %c0_3 = arith.constant 0 : index
    %c0_4 = arith.constant 0 : index
    %3 = vector.load %arg3[%c0_3, %c0_4] : memref<1x256xf32, #tpu.memory_space<vmem>>, vector<1x256xf32>
    %4 = vector.broadcast %3 : vector<1x256xf32> to vector<8x256xf32>
    %5 = arith.addf %2, %4 : vector<8x256xf32>
    %cst_5 = arith.constant 0.000000e+00 : f32
    %6 = vector.broadcast %cst_5 : f32 to vector<8x256xf32>
    %7 = arith.maximumf %5, %6 : vector<8x256xf32>
    %c0_6 = arith.constant 0 : index
    %c0_7 = arith.constant 0 : index
    %c0_8 = arith.constant 0 : index
    %8 = vector.load %arg4[%c0_6, %c0_7, %c0_8] : memref<2x256x256xf32, #tpu.memory_space<vmem>>, vector<1x256x256xf32>
    %9 = vector.shape_cast %8 : vector<1x256x256xf32> to vector<256x256xf32>
    %cst_9 = arith.constant dense<0.000000e+00> : vector<8x256xf32>
    %10 = tpu.matmul %7, %9, %cst_9 {dimension_numbers = #tpu.dot_dimension_numbers<[1], [0], [0], [1], [0, 0, 1, 1], [], []>} : vector<8x256xf32>, vector<256x256xf32>, vector<8x256xf32> -> vector<8x256xf32>
    %c0_10 = arith.constant 0 : index
    %c0_11 = arith.constant 0 : index
    %c0_12 = arith.constant 0 : index
    %11 = vector.load %arg5[%c0_10, %c0_11, %c0_12] : memref<2x1x256xf32, #tpu.memory_space<vmem>>, vector<1x1x256xf32>
    %12 = vector.shape_cast %11 : vector<1x1x256xf32> to vector<1x256xf32>
    %13 = vector.broadcast %12 : vector<1x256xf32> to vector<8x256xf32>
    %14 = arith.addf %10, %13 : vector<8x256xf32>
    %cst_13 = arith.constant 0.000000e+00 : f32
    %15 = vector.broadcast %cst_13 : f32 to vector<8x256xf32>
    %16 = arith.maximumf %14, %15 : vector<8x256xf32>
    %c1 = arith.constant 1 : index
    %c0_14 = arith.constant 0 : index
    %c0_15 = arith.constant 0 : index
    %17 = vector.load %arg4[%c1, %c0_14, %c0_15] : memref<2x256x256xf32, #tpu.memory_space<vmem>>, vector<1x256x256xf32>
    %18 = vector.shape_cast %17 : vector<1x256x256xf32> to vector<256x256xf32>
    %cst_16 = arith.constant dense<0.000000e+00> : vector<8x256xf32>
    %19 = tpu.matmul %16, %18, %cst_16 {dimension_numbers = #tpu.dot_dimension_numbers<[1], [0], [0], [1], [0, 0, 1, 1], [], []>} : vector<8x256xf32>, vector<256x256xf32>, vector<8x256xf32> -> vector<8x256xf32>
    %c1_17 = arith.constant 1 : index
    %c0_18 = arith.constant 0 : index
    %c0_19 = arith.constant 0 : index
    %20 = vector.load %arg5[%c1_17, %c0_18, %c0_19] : memref<2x1x256xf32, #tpu.memory_space<vmem>>, vector<1x1x256xf32>
    %21 = vector.shape_cast %20 : vector<1x1x256xf32> to vector<1x256xf32>
    %22 = vector.broadcast %21 : vector<1x256xf32> to vector<8x256xf32>
    %23 = arith.addf %19, %22 : vector<8x256xf32>
    %cst_20 = arith.constant 0.000000e+00 : f32
    %24 = vector.broadcast %cst_20 : f32 to vector<8x256xf32>
    %25 = arith.maximumf %23, %24 : vector<8x256xf32>
    %c0_21 = arith.constant 0 : index
    %c0_22 = arith.constant 0 : index
    %26 = vector.load %arg6[%c0_21, %c0_22] : memref<256x128xf32, #tpu.memory_space<vmem>>, vector<256x128xf32>
    %cst_23 = arith.constant dense<0.000000e+00> : vector<8x128xf32>
    %27 = tpu.matmul %25, %26, %cst_23 {dimension_numbers = #tpu.dot_dimension_numbers<[1], [0], [0], [1], [0, 0, 1, 1], [], []>} : vector<8x256xf32>, vector<256x128xf32>, vector<8x128xf32> -> vector<8x128xf32>
    %c0_24 = arith.constant 0 : index
    %c0_25 = arith.constant 0 : index
    %28 = vector.load %arg7[%c0_24, %c0_25] : memref<1x128xf32, #tpu.memory_space<vmem>>, vector<1x128xf32>
    %29 = vector.broadcast %28 : vector<1x128xf32> to vector<8x128xf32>
    %30 = arith.addf %27, %29 : vector<8x128xf32>
    %31 = math.tanh %30 : vector<8x128xf32>
    %c0_26 = arith.constant 0 : index
    %c0_27 = arith.constant 0 : index
    %32 = vector.load %arg8[%c0_26, %c0_27] : memref<8x128xf32, #tpu.memory_space<vmem>>, vector<8x128xf32>
    tpu.vector_store %arg8[%c0_26, %c0_27], %31 {strides = array<i32>} : memref<8x128xf32, #tpu.memory_space<vmem>>, vector<8x128xf32>,
    return
  }
  func.func @transform_0(%arg0: i32) -> (i32, i32) {
    %c0_i32 = arith.constant 0 : i32
    %c0_i32_0 = arith.constant 0 : i32
    return %arg0, %c0_i32 : i32, i32
  }
  func.func @transform_1(%arg0: i32) -> (i32, i32) {
    %c0_i32 = arith.constant 0 : i32
    %c0_i32_0 = arith.constant 0 : i32
    %c0_i32_1 = arith.constant 0 : i32
    return %c0_i32, %c0_i32_0 : i32, i32
  }
  func.func @transform_2(%arg0: i32) -> (i32, i32) {
    %c0_i32 = arith.constant 0 : i32
    %c0_i32_0 = arith.constant 0 : i32
    %c0_i32_1 = arith.constant 0 : i32
    return %c0_i32, %c0_i32_0 : i32, i32
  }
  func.func @transform_3(%arg0: i32) -> (i32, i32, i32) {
    %c0_i32 = arith.constant 0 : i32
    %c0_i32_0 = arith.constant 0 : i32
    %c0_i32_1 = arith.constant 0 : i32
    %c0_i32_2 = arith.constant 0 : i32
    return %c0_i32, %c0_i32_0, %c0_i32_1 : i32, i32, i32
  }
  func.func @transform_4(%arg0: i32) -> (i32, i32, i32) {
    %c0_i32 = arith.constant 0 : i32
    %c0_i32_0 = arith.constant 0 : i32
    %c0_i32_1 = arith.constant 0 : i32
    %c0_i32_2 = arith.constant 0 : i32
    return %c0_i32, %c0_i32_0, %c0_i32_1 : i32, i32, i32
  }
  func.func @transform_5(%arg0: i32) -> (i32, i32) {
    %c0_i32 = arith.constant 0 : i32
    %c0_i32_0 = arith.constant 0 : i32
    %c0_i32_1 = arith.constant 0 : i32
    return %c0_i32, %c0_i32_0 : i32, i32
  }
  func.func @transform_6(%arg0: i32) -> (i32, i32) {
    %c0_i32 = arith.constant 0 : i32
    %c0_i32_0 = arith.constant 0 : i32
    %c0_i32_1 = arith.constant 0 : i32
    return %c0_i32, %c0_i32_0 : i32, i32
  }
  func.func @transform_7(%arg0: i32) -> (i32, i32) {
    %c0_i32 = arith.constant 0 : i32
    %c0_i32_0 = arith.constant 0 : i32
    return %arg0, %c0_i32 : i32, i32
  }
}

</mosaic_0001>

<llo_original>
// kernel: tpu_custom_call.1
$region0: #{tpu_custom_call.1}
  #allocation0 [shape = 'u32[]', space=smem, size = 0x4, offset = 0x4, fixed_abs, tag = 'smem constant byte address 0x4 - core index']
  #allocation1 [shape = 'u32[144,128]{1,0:T(1,128)}', space=vmem, size = 0x12000, scoped, tag = 'internal scratch']
  %s0 = inlined_call_operand.hbm [shape: f32[8,128], index: 0, kind: input, shape index: {}]
  %s1 = inlined_call_operand.hbm [shape: f32[128,256], index: 1, kind: input, shape index: {}]
  %s2 = inlined_call_operand.vmem [shape: f32[1,256], index: 2, kind: input, shape index: {}]
  %s3 = inlined_call_operand.hbm [shape: f32[2,256,256], index: 3, kind: input, shape index: {}]
  %s4 = inlined_call_operand.vmem [shape: f32[2,1,256], index: 4, kind: input, shape index: {}]
  %s5 = inlined_call_operand.hbm [shape: f32[256,128], index: 5, kind: input, shape index: {}]
  %s6 = inlined_call_operand.vmem [shape: f32[1,128], index: 6, kind: input, shape index: {}]
  %s7 = inlined_call_operand.hbm [shape: f32[8,128], index: 7, kind: output, shape index: {}]
  %s8 = sld [smem:[#allocation0]]
  $region54: #{tpu_custom_call.1} parent=0
    _
  %s10 = ssub.s32 1, %s8
  %s11 = scalar_select 0, %s10, %s8
  $region1: #{tpu_custom_call.1} parent=0
    #allocation2 [shape = 'u8[4096]{0}', space=vmem, size = 0x1000, scoped, tag = 'input window, operand 0, single buffered']
    #allocation3 [shape = 's32[1]{0}', space=sflag, size = 0x4, scoped, tag = 'scoped memory for tpu_custom_call.1']
    #allocation4 [shape = 's32[1]{0}', space=sflag, size = 0x4, scoped, tag = 'scoped memory for tpu_custom_call.1']
    #allocation5 [shape = 'u8[131072]{0}', space=vmem, size = 0x20000, scoped, tag = 'input window, operand 1, single buffered']
    #allocation6 [shape = 's32[1]{0}', space=sflag, size = 0x4, scoped, tag = 'scoped memory for tpu_custom_call.1']
    #allocation7 [shape = 'u8[524288]{0}', space=vmem, size = 0x80000, scoped, tag = 'input window, operand 3, single buffered']
    #allocation8 [shape = 'u8[131072]{0}', space=vmem, size = 0x20000, scoped, tag = 'input window, operand 5, single buffered']
    #allocation9 [shape = 's32[1]{0}', space=sflag, size = 0x4, scoped, tag = 'scoped memory for tpu_custom_call.1']
    #allocation10 [shape = 'u8[4096]{0}', space=vmem, size = 0x1000, scoped, tag = 'output window, operand 0, single buffered']
    %12 = vsyncpa [#allocation3], 0
    %13 = vsyncpa [#allocation6], 0
    %14 = vsyncpa [#allocation9], 0
    %15 = vsyncpa [#allocation4], 0
    // Predicated region
    $region2: #{tpu_custom_call.1} parent=1 // pred_check
      _
    $region3: #{tpu_custom_call.1} parent=1 // pred_check_branch
      %17 = sbr.rel (0) target = $region5
    $region4: #{tpu_custom_call.1} parent=1 // pred_region
      %s19 = ssub.s32 128, 128
      %20 = vsyncadd [#allocation3], %s19
      %s22 = sshll.u32 [#allocation2], 4
      %s23 = int_to_ptr.vmem [resolvable:$true] %s22
      %25 = dma.hbm_to_vmem [thread:$0]  %s0, 128, %s23, [#allocation3]
    $region5: #{tpu_custom_call.1} parent=1 // pred_fallthru
      _
    // Predicated region
    $region6: #{tpu_custom_call.1} parent=1 // pred_check
      _
    $region7: #{tpu_custom_call.1} parent=1 // pred_check_branch
      %27 = sbr.rel (0) target = $region9
    $region8: #{tpu_custom_call.1} parent=1 // pred_region
      %s29 = ssub.s32 4096, 4096
      %30 = vsyncadd [#allocation6], %s29
      %s31 = sshll.u32 [#allocation5], 4
      %s32 = int_to_ptr.vmem [resolvable:$true] %s31
      %37 = dma.hbm_to_vmem [thread:$0]  %s1, 4096, %s32, [#allocation6], 256, 256, 16
    $region9: #{tpu_custom_call.1} parent=1 // pred_fallthru
      _
    // Predicated region
    $region10: #{tpu_custom_call.1} parent=1 // pred_check
      _
    $region11: #{tpu_custom_call.1} parent=1 // pred_check_branch
      %39 = sbr.rel (0) target = $region13
    $region12: #{tpu_custom_call.1} parent=1 // pred_region
      _
    $region13: #{tpu_custom_call.1} parent=1 // pred_fallthru
      _
    // Predicated region
    $region14: #{tpu_custom_call.1} parent=1 // pred_check
      _
    $region15: #{tpu_custom_call.1} parent=1 // pred_check_branch
      %41 = sbr.rel (0) target = $region17
    $region16: #{tpu_custom_call.1} parent=1 // pred_region
      %s43 = ssub.s32 16384, 16384
      %44 = vsyncadd [#allocation6], %s43
      %s45 = sshll.u32 [#allocation7], 4
      %s46 = int_to_ptr.vmem [resolvable:$true] %s45
      %51 = dma.hbm_to_vmem [thread:$0]  %s3, 16384, %s46, [#allocation6], 256, 256, 16
    $region17: #{tpu_custom_call.1} parent=1 // pred_fallthru
      _
    // Predicated region
    $region18: #{tpu_custom_call.1} parent=1 // pred_check
      _
    $region19: #{tpu_custom_call.1} parent=1 // pred_check_branch
      %53 = sbr.rel (0) target = $region21
    $region20: #{tpu_custom_call.1} parent=1 // pred_region
      _
    $region21: #{tpu_custom_call.1} parent=1 // pred_fallthru
      _
    // Predicated region
    $region22: #{tpu_custom_call.1} parent=1 // pred_check
      _
    $region23: #{tpu_custom_call.1} parent=1 // pred_check_branch
      %55 = sbr.rel (0) target = $region25
    $region24: #{tpu_custom_call.1} parent=1 // pred_region
      %s57 = ssub.s32 4096, 4096
      %58 = vsyncadd [#allocation9], %s57
      %s59 = sshll.u32 [#allocation8], 4
      %s60 = int_to_ptr.vmem [resolvable:$true] %s59
      %65 = dma.hbm_to_vmem [thread:$0]  %s5, 4096, %s60, [#allocation9], 128, 128, 8
    $region25: #{tpu_custom_call.1} parent=1 // pred_fallthru
      _
    // Predicated region
    $region26: #{tpu_custom_call.1} parent=1 // pred_check
      _
    $region27: #{tpu_custom_call.1} parent=1 // pred_check_branch
      %67 = sbr.rel (0) target = $region29
    $region28: #{tpu_custom_call.1} parent=1 // pred_region
      _
    $region29: #{tpu_custom_call.1} parent=1 // pred_fallthru
      _
    // Predicated region
    $region30: #{tpu_custom_call.1} parent=1 // pred_check
      _
    $region31: #{tpu_custom_call.1} parent=1 // pred_check_branch
      %69 = sbr.rel (0) target = $region33
    $region32: #{tpu_custom_call.1} parent=1 // pred_region
      %70 = dma.done [#allocation3], 128
    $region33: #{tpu_custom_call.1} parent=1 // pred_fallthru
      _
    // Predicated region
    $region34: #{tpu_custom_call.1} parent=1 // pred_check
      _
    $region35: #{tpu_custom_call.1} parent=1 // pred_check_branch
      %72 = sbr.rel (0) target = $region37
    $region36: #{tpu_custom_call.1} parent=1 // pred_region
      %73 = dma.done [#allocation6], 4096
    $region37: #{tpu_custom_call.1} parent=1 // pred_fallthru
      _
    // Predicated region
    $region38: #{tpu_custom_call.1} parent=1 // pred_check
      _
    $region39: #{tpu_custom_call.1} parent=1 // pred_check_branch
      %75 = sbr.rel (0) target = $region41
    $region40: #{tpu_custom_call.1} parent=1 // pred_region
      %76 = dma.done [#allocation6], 16384
    $region41: #{tpu_custom_call.1} parent=1 // pred_fallthru
      _
    // Predicated region
    $region42: #{tpu_custom_call.1} parent=1 // pred_check
      _
    $region43: #{tpu_custom_call.1} parent=1 // pred_check_branch
      %78 = sbr.rel (0) target = $region45
    $region44: #{tpu_custom_call.1} parent=1 // pred_region
      %79 = dma.done [#allocation9], 4096
    $region45: #{tpu_custom_call.1} parent=1 // pred_fallthru
      _
    %v80 = vld [vmem:[#allocation2] sm:$0xff]
    %v81 = vld [vmem:[#allocation5] sm:$0xff]
    %v82 = vld [vmem:[#allocation5 + $0x8] sm:$0xff]
    %v83 = vld [vmem:[#allocation5 + $0x10] sm:$0xff]
    %v84 = vld [vmem:[#allocation5 + $0x18] sm:$0xff]
    %v85 = vld [vmem:[#allocation5 + $0x20] sm:$0xff]
    %v86 = vld [vmem:[#allocation5 + $0x28] sm:$0xff]
    %v87 = vld [vmem:[#allocation5 + $0x30] sm:$0xff]
    %v88 = vld [vmem:[#allocation5 + $0x38] sm:$0xff]
    %v89 = vld [vmem:[#allocation5 + $0x40] sm:$0xff]
    %v90 = vld [vmem:[#allocation5 + $0x48] sm:$0xff]
    %v91 = vld [vmem:[#allocation5 + $0x50] sm:$0xff]
    %v92 = vld [vmem:[#allocation5 + $0x58] sm:$0xff]
    %v93 = vld [vmem:[#allocation5 + $0x60] sm:$0xff]
    %v94 = vld [vmem:[#allocation5 + $0x68] sm:$0xff]
    %v95 = vld [vmem:[#allocation5 + $0x70] sm:$0xff]
    %v96 = vld [vmem:[#allocation5 + $0x78] sm:$0xff]
    %v97 = vld [vmem:[#allocation5 + $0x80] sm:$0xff]
    %v98 = vld [vmem:[#allocation5 + $0x88] sm:$0xff]
    %v99 = vld [vmem:[#allocation5 + $0x90] sm:$0xff]
    %v100 = vld [vmem:[#allocation5 + $0x98] sm:$0xff]
    %v101 = vld [vmem:[#allocation5 + $0xa0] sm:$0xff]
    %v102 = vld [vmem:[#allocation5 + $0xa8] sm:$0xff]
    %v103 = vld [vmem:[#allocation5 + $0xb0] sm:$0xff]
    %v104 = vld [vmem:[#allocation5 + $0xb8] sm:$0xff]
    %v105 = vld [vmem:[#allocation5 + $0xc0] sm:$0xff]
    %v106 = vld [vmem:[#allocation5 + $0xc8] sm:$0xff]
    %v107 = vld [vmem:[#allocation5 + $0xd0] sm:$0xff]
    %v108 = vld [vmem:[#allocation5 + $0xd8] sm:$0xff]
    %v109 = vld [vmem:[#allocation5 + $0xe0] sm:$0xff]
    %v110 = vld [vmem:[#allocation5 + $0xe8] sm:$0xff]
    %v111 = vld [vmem:[#allocation5 + $0xf0] sm:$0xff]
    %v112 = vld [vmem:[#allocation5 + $0xf8] sm:$0xff]
    %v113 = vld [vmem:[%s2] sm:$0x3]
    %v115 = vlaneseq
    %v116 = vshrl.u32 %v115, 7
    %v117 = vsub.s32 0, %v116
    %v118 = vrot.slane %v113, %v117
    %v119 = vlaneseq
    %v120 = vshrl.u32 %v119, 7
    %v121 = vsub.s32 1, %v120
    %v122 = vrot.slane %v113, %v121
    %125 = vmatprep.subr.mxu0 %v82
    %126 = vmatpush1.msra.mxu0 %v81
    %127 = vmatprep.subr.mxu0 %v84
    %128 = vmatpush1.msra.mxu0 %v83
    %129 = vmatprep.subr.mxu0 %v86
    %130 = vmatpush1.msra.mxu0 %v85
    %131 = vmatprep.subr.mxu0 %v88
    %132 = vmatpush1.msra.mxu0 %v87
    %133 = vmatprep.subr.mxu0 %v90
    %134 = vmatpush1.msra.mxu0 %v89
    %135 = vmatprep.subr.mxu0 %v92
    %136 = vmatpush1.msra.mxu0 %v91
    %137 = vmatprep.subr.mxu0 %v94
    %138 = vmatpush1.msra.mxu0 %v93
    %139 = vmatprep.subr.mxu0 %v96
    %140 = vmatpush1.msra.mxu0 %v95
    %141 = vmatprep.subr.mxu0 %v98
    %142 = vmatpush1.msra.mxu0 %v97
    %143 = vmatprep.subr.mxu0 %v100
    %144 = vmatpush1.msra.mxu0 %v99
    %145 = vmatprep.subr.mxu0 %v102
    %146 = vmatpush1.msra.mxu0 %v101
    %147 = vmatprep.subr.mxu0 %v104
    %148 = vmatpush1.msra.mxu0 %v103
    %149 = vmatprep.subr.mxu0 %v106
    %150 = vmatpush1.msra.mxu0 %v105
    %151 = vmatprep.subr.mxu0 %v108
    %152 = vmatpush1.msra.mxu0 %v107
    %153 = vmatprep.subr.mxu0 %v110
    %154 = vmatpush1.msra.mxu0 %v109
    %155 = vmatprep.subr.mxu0 %v112
    %156 = vmatpush1.msra.mxu0 %v111
    %157 = vmatprep.subr.mxu0 0.0
    %158 = vmatpush1.msra.mxu0 0.0
    %159 = vmatprep.subr.mxu0 0.0
    %160 = vmatpush1.msra.mxu0 0.0
    %161 = vmatprep.subr.mxu0 0.0
    %162 = vmatpush1.msra.mxu0 0.0
    %163 = vmatprep.subr.mxu0 0.0
    %164 = vmatpush1.msra.mxu0 0.0
    %165 = vmatprep.subr.mxu0 0.0
    %166 = vmatpush1.msra.mxu0 0.0
    %167 = vmatprep.subr.mxu0 0.0
    %168 = vmatpush1.msra.mxu0 0.0
    %169 = vmatprep.subr.mxu0 0.0
    %170 = vmatpush1.msra.mxu0 0.0
    %171 = vmatprep.subr.mxu0 0.0
    %172 = vmatpush1.msra.mxu0 0.0
    %173 = vmatprep.subr.mxu0 0.0
    %174 = vmatpush1.msra.mxu0 0.0
    %175 = vmatprep.subr.mxu0 0.0
    %176 = vmatpush1.msra.mxu0 0.0
    %177 = vmatprep.subr.mxu0 0.0
    %178 = vmatpush1.msra.mxu0 0.0
    %179 = vmatprep.subr.mxu0 0.0
    %180 = vmatpush1.msra.mxu0 0.0
    %181 = vmatprep.subr.mxu0 0.0
    %182 = vmatpush1.msra.mxu0 0.0
    %183 = vmatprep.subr.mxu0 0.0
    %184 = vmatpush1.msra.mxu0 0.0
    %185 = vmatprep.subr.mxu0 0.0
    %186 = vmatpush1.msra.mxu0 0.0
    %187 = vmatprep.subr.mxu0 0.0
    %188 = vmatpush1.msra.mxu0 0.0
    %189 = vmatprep.mubr.f32.mxu0 0.0
    %190 = vmatmul.mubr.f32.gmra.mrb[0].mxu0 %v80
    %v191 = vpop.f32.mrb[0].mxu0
    %v192 = vadd.f32 %v118, %v191
    %v193 = vpop.f32.mrb[0].mxu0
    %v194 = vadd.f32 %v122, %v193
    %195 = vdwg.mxu0
    %v196 = vmax.f32 %v192, 0.0
    %v197 = vmax.f32 %v194, 0.0
    %v198 = vld [vmem:[#allocation7] sm:$0xff]
    %v199 = vld [vmem:[#allocation7 + $0x8] sm:$0xff]
    %v200 = vld [vmem:[#allocation7 + $0x10] sm:$0xff]
    %v201 = vld [vmem:[#allocation7 + $0x18] sm:$0xff]
    %v202 = vld [vmem:[#allocation7 + $0x20] sm:$0xff]
    %v203 = vld [vmem:[#allocation7 + $0x28] sm:$0xff]
    %v204 = vld [vmem:[#allocation7 + $0x30] sm:$0xff]
    %v205 = vld [vmem:[#allocation7 + $0x38] sm:$0xff]
    %v206 = vld [vmem:[#allocation7 + $0x40] sm:$0xff]
    %v207 = vld [vmem:[#allocation7 + $0x48] sm:$0xff]
    %v208 = vld [vmem:[#allocation7 + $0x50] sm:$0xff]
    %v209 = vld [vmem:[#allocation7 + $0x58] sm:$0xff]
    %v210 = vld [vmem:[#allocation7 + $0x60] sm:$0xff]
    %v211 = vld [vmem:[#allocation7 + $0x68] sm:$0xff]
    %v212 = vld [vmem:[#allocation7 + $0x70] sm:$0xff]
    %v213 = vld [vmem:[#allocation7 + $0x78] sm:$0xff]
    %v214 = vld [vmem:[#allocation7 + $0x80] sm:$0xff]
    %v215 = vld [vmem:[#allocation7 + $0x88] sm:$0xff]
    %v216 = vld [vmem:[#allocation7 + $0x90] sm:$0xff]
    %v217 = vld [vmem:[#allocation7 + $0x98] sm:$0xff]
    %v218 = vld [vmem:[#allocation7 + $0xa0] sm:$0xff]
    %v219 = vld [vmem:[#allocation7 + $0xa8] sm:$0xff]
    %v220 = vld [vmem:[#allocation7 + $0xb0] sm:$0xff]
    %v221 = vld [vmem:[#allocation7 + $0xb8] sm:$0xff]
    %v222 = vld [vmem:[#allocation7 + $0xc0] sm:$0xff]
    %v223 = vld [vmem:[#allocation7 + $0xc8] sm:$0xff]
    %v224 = vld [vmem:[#allocation7 + $0xd0] sm:$0xff]
    %v225 = vld [vmem:[#allocation7 + $0xd8] sm:$0xff]
    %v226 = vld [vmem:[#allocation7 + $0xe0] sm:$0xff]
    %v227 = vld [vmem:[#allocation7 + $0xe8] sm:$0xff]
    %v228 = vld [vmem:[#allocation7 + $0xf0] sm:$0xff]
    %v229 = vld [vmem:[#allocation7 + $0xf8] sm:$0xff]
    %v230 = vld [vmem:[#allocation7 + $0x100] sm:$0xff]
    %v231 = vld [vmem:[#allocation7 + $0x108] sm:$0xff]
    %v232 = vld [vmem:[#allocation7 + $0x110] sm:$0xff]
    %v233 = vld [vmem:[#allocation7 + $0x118] sm:$0xff]
    %v234 = vld [vmem:[#allocation7 + $0x120] sm:$0xff]
    %v235 = vld [vmem:[#allocation7 + $0x128] sm:$0xff]
    %v236 = vld [vmem:[#allocation7 + $0x130] sm:$0xff]
    %v237 = vld [vmem:[#allocation7 + $0x138] sm:$0xff]
    %v238 = vld [vmem:[#allocation7 + $0x140] sm:$0xff]
    %v239 = vld [vmem:[#allocation7 + $0x148] sm:$0xff]
    %v240 = vld [vmem:[#allocation7 + $0x150] sm:$0xff]
    %v241 = vld [vmem:[#allocation7 + $0x158] sm:$0xff]
    %v242 = vld [vmem:[#allocation7 + $0x160] sm:$0xff]
    %v243 = vld [vmem:[#allocation7 + $0x168] sm:$0xff]
    %v244 = vld [vmem:[#allocation7 + $0x170] sm:$0xff]
    %v245 = vld [vmem:[#allocation7 + $0x178] sm:$0xff]
    %v246 = vld [vmem:[#allocation7 + $0x180] sm:$0xff]
    %v247 = vld [vmem:[#allocation7 + $0x188] sm:$0xff]
    %v248 = vld [vmem:[#allocation7 + $0x190] sm:$0xff]
    %v249 = vld [vmem:[#allocation7 + $0x198] sm:$0xff]
    %v250 = vld [vmem:[#allocation7 + $0x1a0] sm:$0xff]
    %v251 = vld [vmem:[#allocation7 + $0x1a8] sm:$0xff]
    %v252 = vld [vmem:[#allocation7 + $0x1b0] sm:$0xff]
    %v253 = vld [vmem:[#allocation7 + $0x1b8] sm:$0xff]
    %v254 = vld [vmem:[#allocation7 + $0x1c0] sm:$0xff]
    %v255 = vld [vmem:[#allocation7 + $0x1c8] sm:$0xff]
    %v256 = vld [vmem:[#allocation7 + $0x1d0] sm:$0xff]
    %v257 = vld [vmem:[#allocation7 + $0x1d8] sm:$0xff]
    %v258 = vld [vmem:[#allocation7 + $0x1e0] sm:$0xff]
    %v259 = vld [vmem:[#allocation7 + $0x1e8] sm:$0xff]
    %v260 = vld [vmem:[#allocation7 + $0x1f0] sm:$0xff]
    %v261 = vld [vmem:[#allocation7 + $0x1f8] sm:$0xff]
    %v262 = vld [vmem:[%s4] sm:$0x3]
    %v264 = vlaneseq
    %v265 = vshrl.u32 %v264, 7
    %v266 = vsub.s32 0, %v265
    %v267 = vrot.slane %v262, %v266
    %v268 = vlaneseq
    %v269 = vshrl.u32 %v268, 7
    %v270 = vsub.s32 1, %v269
    %v271 = vrot.slane %v262, %v270
    %274 = vmatprep.subr.mxu0 %v199
    %275 = vmatpush1.msra.mxu0 %v198
    %276 = vmatprep.subr.mxu0 %v201
    %277 = vmatpush1.msra.mxu0 %v200
    %278 = vmatprep.subr.mxu0 %v203
    %279 = vmatpush1.msra.mxu0 %v202
    %280 = vmatprep.subr.mxu0 %v205
    %281 = vmatpush1.msra.mxu0 %v204
    %282 = vmatprep.subr.mxu0 %v207
    %283 = vmatpush1.msra.mxu0 %v206
    %284 = vmatprep.subr.mxu0 %v209
    %285 = vmatpush1.msra.mxu0 %v208
    %286 = vmatprep.subr.mxu0 %v211
    %287 = vmatpush1.msra.mxu0 %v210
    %288 = vmatprep.subr.mxu0 %v213
    %289 = vmatpush1.msra.mxu0 %v212
    %290 = vmatprep.subr.mxu0 %v215
    %291 = vmatpush1.msra.mxu0 %v214
    %292 = vmatprep.subr.mxu0 %v217
    %293 = vmatpush1.msra.mxu0 %v216
    %294 = vmatprep.subr.mxu0 %v219
    %295 = vmatpush1.msra.mxu0 %v218
    %296 = vmatprep.subr.mxu0 %v221
    %297 = vmatpush1.msra.mxu0 %v220
    %298 = vmatprep.subr.mxu0 %v223
    %299 = vmatpush1.msra.mxu0 %v222
    %300 = vmatprep.subr.mxu0 %v225
    %301 = vmatpush1.msra.mxu0 %v224
    %302 = vmatprep.subr.mxu0 %v227
    %303 = vmatpush1.msra.mxu0 %v226
    %304 = vmatprep.subr.mxu0 %v229
    %305 = vmatpush1.msra.mxu0 %v228
    %306 = vmatprep.subr.mxu0 %v231
    %307 = vmatpush1.msra.mxu0 %v230
    %308 = vmatprep.subr.mxu0 %v233
    %309 = vmatpush1.msra.mxu0 %v232
    %310 = vmatprep.subr.mxu0 %v235
    %311 = vmatpush1.msra.mxu0 %v234
    %312 = vmatprep.subr.mxu0 %v237
    %313 = vmatpush1.msra.mxu0 %v236
    %314 = vmatprep.subr.mxu0 %v239
    %315 = vmatpush1.msra.mxu0 %v238
    %316 = vmatprep.subr.mxu0 %v241
    %317 = vmatpush1.msra.mxu0 %v240
    %318 = vmatprep.subr.mxu0 %v243
    %319 = vmatpush1.msra.mxu0 %v242
    %320 = vmatprep.subr.mxu0 %v245
    %321 = vmatpush1.msra.mxu0 %v244
    %322 = vmatprep.subr.mxu0 %v247
    %323 = vmatpush1.msra.mxu0 %v246
    %324 = vmatprep.subr.mxu0 %v249
    %325 = vmatpush1.msra.mxu0 %v248
    %326 = vmatprep.subr.mxu0 %v251
    %327 = vmatpush1.msra.mxu0 %v250
    %328 = vmatprep.subr.mxu0 %v253
    %329 = vmatpush1.msra.mxu0 %v252
    %330 = vmatprep.subr.mxu0 %v255
    %331 = vmatpush1.msra.mxu0 %v254
    %332 = vmatprep.subr.mxu0 %v257
    %333 = vmatpush1.msra.mxu0 %v256
    %334 = vmatprep.subr.mxu0 %v259
    %335 = vmatpush1.msra.mxu0 %v258
    %336 = vmatprep.subr.mxu0 %v261
    %337 = vmatpush1.msra.mxu0 %v260
    %338 = vmatprep.mubr.f32.mxu0 %v197
    %339 = vmatmul.mubr.f32.gmra.mrb[0].mxu0 %v196
    %v340 = vpop.f32.mrb[0].mxu0
    %v341 = vadd.f32 %v267, %v340
    %v342 = vpop.f32.mrb[0].mxu0
    %v343 = vadd.f32 %v271, %v342
    %344 = vdwg.mxu0
    %v345 = vmax.f32 %v341, 0.0
    %v346 = vmax.f32 %v343, 0.0
    %s347 = scalar_lea.vmem [#allocation7], 512
    %v348 = vld [vmem:[%s347] sm:$0xff]
    %v349 = vld [vmem:[%s347 + $0x8] sm:$0xff]
    %v350 = vld [vmem:[%s347 + $0x10] sm:$0xff]
    %v351 = vld [vmem:[%s347 + $0x18] sm:$0xff]
    %v352 = vld [vmem:[%s347 + $0x20] sm:$0xff]
    %v353 = vld [vmem:[%s347 + $0x28] sm:$0xff]
    %v354 = vld [vmem:[%s347 + $0x30] sm:$0xff]
    %v355 = vld [vmem:[%s347 + $0x38] sm:$0xff]
    %v356 = vld [vmem:[%s347 + $0x40] sm:$0xff]
    %v357 = vld [vmem:[%s347 + $0x48] sm:$0xff]
    %v358 = vld [vmem:[%s347 + $0x50] sm:$0xff]
    %v359 = vld [vmem:[%s347 + $0x58] sm:$0xff]
    %v360 = vld [vmem:[%s347 + $0x60] sm:$0xff]
    %v361 = vld [vmem:[%s347 + $0x68] sm:$0xff]
    %v362 = vld [vmem:[%s347 + $0x70] sm:$0xff]
    %v363 = vld [vmem:[%s347 + $0x78] sm:$0xff]
    %v364 = vld [vmem:[%s347 + $0x80] sm:$0xff]
    %v365 = vld [vmem:[%s347 + $0x88] sm:$0xff]
    %v366 = vld [vmem:[%s347 + $0x90] sm:$0xff]
    %v367 = vld [vmem:[%s347 + $0x98] sm:$0xff]
    %v368 = vld [vmem:[%s347 + $0xa0] sm:$0xff]
    %v369 = vld [vmem:[%s347 + $0xa8] sm:$0xff]
    %v370 = vld [vmem:[%s347 + $0xb0] sm:$0xff]
    %v371 = vld [vmem:[%s347 + $0xb8] sm:$0xff]
    %v372 = vld [vmem:[%s347 + $0xc0] sm:$0xff]
    %v373 = vld [vmem:[%s347 + $0xc8] sm:$0xff]
    %v374 = vld [vmem:[%s347 + $0xd0] sm:$0xff]
    %v375 = vld [vmem:[%s347 + $0xd8] sm:$0xff]
    %v376 = vld [vmem:[%s347 + $0xe0] sm:$0xff]
    %v377 = vld [vmem:[%s347 + $0xe8] sm:$0xff]
    %v378 = vld [vmem:[%s347 + $0xf0] sm:$0xff]
    %v379 = vld [vmem:[%s347 + $0xf8] sm:$0xff]
    %v380 = vld [vmem:[%s347 + $0x100] sm:$0xff]
    %v381 = vld [vmem:[%s347 + $0x108] sm:$0xff]
    %v382 = vld [vmem:[%s347 + $0x110] sm:$0xff]
    %v383 = vld [vmem:[%s347 + $0x118] sm:$0xff]
    %v384 = vld [vmem:[%s347 + $0x120] sm:$0xff]
    %v385 = vld [vmem:[%s347 + $0x128] sm:$0xff]
    %v386 = vld [vmem:[%s347 + $0x130] sm:$0xff]
    %v387 = vld [vmem:[%s347 + $0x138] sm:$0xff]
    %v388 = vld [vmem:[%s347 + $0x140] sm:$0xff]
    %v389 = vld [vmem:[%s347 + $0x148] sm:$0xff]
    %v390 = vld [vmem:[%s347 + $0x150] sm:$0xff]
    %v391 = vld [vmem:[%s347 + $0x158] sm:$0xff]
    %v392 = vld [vmem:[%s347 + $0x160] sm:$0xff]
    %v393 = vld [vmem:[%s347 + $0x168] sm:$0xff]
    %v394 = vld [vmem:[%s347 + $0x170] sm:$0xff]
    %v395 = vld [vmem:[%s347 + $0x178] sm:$0xff]
    %v396 = vld [vmem:[%s347 + $0x180] sm:$0xff]
    %v397 = vld [vmem:[%s347 + $0x188] sm:$0xff]
    %v398 = vld [vmem:[%s347 + $0x190] sm:$0xff]
    %v399 = vld [vmem:[%s347 + $0x198] sm:$0xff]
    %v400 = vld [vmem:[%s347 + $0x1a0] sm:$0xff]
    %v401 = vld [vmem:[%s347 + $0x1a8] sm:$0xff]
    %v402 = vld [vmem:[%s347 + $0x1b0] sm:$0xff]
    %v403 = vld [vmem:[%s347 + $0x1b8] sm:$0xff]
    %v404 = vld [vmem:[%s347 + $0x1c0] sm:$0xff]
    %v405 = vld [vmem:[%s347 + $0x1c8] sm:$0xff]
    %v406 = vld [vmem:[%s347 + $0x1d0] sm:$0xff]
    %v407 = vld [vmem:[%s347 + $0x1d8] sm:$0xff]
    %v408 = vld [vmem:[%s347 + $0x1e0] sm:$0xff]
    %v409 = vld [vmem:[%s347 + $0x1e8] sm:$0xff]
    %v410 = vld [vmem:[%s347 + $0x1f0] sm:$0xff]
    %v411 = vld [vmem:[%s347 + $0x1f8] sm:$0xff]
    %s412 = scalar_lea.vmem %s4, 2
    %v413 = vld [vmem:[%s412] sm:$0x3]
    %v415 = vlaneseq
    %v416 = vshrl.u32 %v415, 7
    %v417 = vsub.s32 0, %v416
    %v418 = vrot.slane %v413, %v417
    %v419 = vlaneseq
    %v420 = vshrl.u32 %v419, 7
    %v421 = vsub.s32 1, %v420
    %v422 = vrot.slane %v413, %v421
    %425 = vmatprep.subr.mxu0 %v349
    %426 = vmatpush1.msra.mxu0 %v348
    %427 = vmatprep.subr.mxu0 %v351
    %428 = vmatpush1.msra.mxu0 %v350
    %429 = vmatprep.subr.mxu0 %v353
    %430 = vmatpush1.msra.mxu0 %v352
    %431 = vmatprep.subr.mxu0 %v355
    %432 = vmatpush1.msra.mxu0 %v354
    %433 = vmatprep.subr.mxu0 %v357
    %434 = vmatpush1.msra.mxu0 %v356
    %435 = vmatprep.subr.mxu0 %v359
    %436 = vmatpush1.msra.mxu0 %v358
    %437 = vmatprep.subr.mxu0 %v361
    %438 = vmatpush1.msra.mxu0 %v360
    %439 = vmatprep.subr.mxu0 %v363
    %440 = vmatpush1.msra.mxu0 %v362
    %441 = vmatprep.subr.mxu0 %v365
    %442 = vmatpush1.msra.mxu0 %v364
    %443 = vmatprep.subr.mxu0 %v367
    %444 = vmatpush1.msra.mxu0 %v366
    %445 = vmatprep.subr.mxu0 %v369
    %446 = vmatpush1.msra.mxu0 %v368
    %447 = vmatprep.subr.mxu0 %v371
    %448 = vmatpush1.msra.mxu0 %v370
    %449 = vmatprep.subr.mxu0 %v373
    %450 = vmatpush1.msra.mxu0 %v372
    %451 = vmatprep.subr.mxu0 %v375
    %452 = vmatpush1.msra.mxu0 %v374
    %453 = vmatprep.subr.mxu0 %v377
    %454 = vmatpush1.msra.mxu0 %v376
    %455 = vmatprep.subr.mxu0 %v379
    %456 = vmatpush1.msra.mxu0 %v378
    %457 = vmatprep.subr.mxu0 %v381
    %458 = vmatpush1.msra.mxu0 %v380
    %459 = vmatprep.subr.mxu0 %v383
    %460 = vmatpush1.msra.mxu0 %v382
    %461 = vmatprep.subr.mxu0 %v385
    %462 = vmatpush1.msra.mxu0 %v384
    %463 = vmatprep.subr.mxu0 %v387
    %464 = vmatpush1.msra.mxu0 %v386
    %465 = vmatprep.subr.mxu0 %v389
    %466 = vmatpush1.msra.mxu0 %v388
    %467 = vmatprep.subr.mxu0 %v391
    %468 = vmatpush1.msra.mxu0 %v390
    %469 = vmatprep.subr.mxu0 %v393
    %470 = vmatpush1.msra.mxu0 %v392
    %471 = vmatprep.subr.mxu0 %v395
    %472 = vmatpush1.msra.mxu0 %v394
    %473 = vmatprep.subr.mxu0 %v397
    %474 = vmatpush1.msra.mxu0 %v396
    %475 = vmatprep.subr.mxu0 %v399
    %476 = vmatpush1.msra.mxu0 %v398
    %477 = vmatprep.subr.mxu0 %v401
    %478 = vmatpush1.msra.mxu0 %v400
    %479 = vmatprep.subr.mxu0 %v403
    %480 = vmatpush1.msra.mxu0 %v402
    %481 = vmatprep.subr.mxu0 %v405
    %482 = vmatpush1.msra.mxu0 %v404
    %483 = vmatprep.subr.mxu0 %v407
    %484 = vmatpush1.msra.mxu0 %v406
    %485 = vmatprep.subr.mxu0 %v409
    %486 = vmatpush1.msra.mxu0 %v408
    %487 = vmatprep.subr.mxu0 %v411
    %488 = vmatpush1.msra.mxu0 %v410
    %489 = vmatprep.mubr.f32.mxu0 %v346
    %490 = vmatmul.mubr.f32.gmra.mrb[0].mxu0 %v345
    %v491 = vpop.f32.mrb[0].mxu0
    %v492 = vadd.f32 %v418, %v491
    %v493 = vpop.f32.mrb[0].mxu0
    %v494 = vadd.f32 %v422, %v493
    %495 = vdwg.mxu0
    %v496 = vmax.f32 %v492, 0.0
    %v497 = vmax.f32 %v494, 0.0
    %v498 = vld [vmem:[#allocation8] sm:$0xff]
    %v499 = vld [vmem:[#allocation8 + $0x8] sm:$0xff]
    %v500 = vld [vmem:[#allocation8 + $0x10] sm:$0xff]
    %v501 = vld [vmem:[#allocation8 + $0x18] sm:$0xff]
    %v502 = vld [vmem:[#allocation8 + $0x20] sm:$0xff]
    %v503 = vld [vmem:[#allocation8 + $0x28] sm:$0xff]
    %v504 = vld [vmem:[#allocation8 + $0x30] sm:$0xff]
    %v505 = vld [vmem:[#allocation8 + $0x38] sm:$0xff]
    %v506 = vld [vmem:[#allocation8 + $0x40] sm:$0xff]
    %v507 = vld [vmem:[#allocation8 + $0x48] sm:$0xff]
    %v508 = vld [vmem:[#allocation8 + $0x50] sm:$0xff]
    %v509 = vld [vmem:[#allocation8 + $0x58] sm:$0xff]
    %v510 = vld [vmem:[#allocation8 + $0x60] sm:$0xff]
    %v511 = vld [vmem:[#allocation8 + $0x68] sm:$0xff]
    %v512 = vld [vmem:[#allocation8 + $0x70] sm:$0xff]
    %v513 = vld [vmem:[#allocation8 + $0x78] sm:$0xff]
    %v514 = vld [vmem:[#allocation8 + $0x80] sm:$0xff]
    %v515 = vld [vmem:[#allocation8 + $0x88] sm:$0xff]
    %v516 = vld [vmem:[#allocation8 + $0x90] sm:$0xff]
    %v517 = vld [vmem:[#allocation8 + $0x98] sm:$0xff]
    %v518 = vld [vmem:[#allocation8 + $0xa0] sm:$0xff]
    %v519 = vld [vmem:[#allocation8 + $0xa8] sm:$0xff]
    %v520 = vld [vmem:[#allocation8 + $0xb0] sm:$0xff]
    %v521 = vld [vmem:[#allocation8 + $0xb8] sm:$0xff]
    %v522 = vld [vmem:[#allocation8 + $0xc0] sm:$0xff]
    %v523 = vld [vmem:[#allocation8 + $0xc8] sm:$0xff]
    %v524 = vld [vmem:[#allocation8 + $0xd0] sm:$0xff]
    %v525 = vld [vmem:[#allocation8 + $0xd8] sm:$0xff]
    %v526 = vld [vmem:[#allocation8 + $0xe0] sm:$0xff]
    %v527 = vld [vmem:[#allocation8 + $0xe8] sm:$0xff]
    %v528 = vld [vmem:[#allocation8 + $0xf0] sm:$0xff]
    %v529 = vld [vmem:[#allocation8 + $0xf8] sm:$0xff]
    %v530 = vld [vmem:[%s6] sm:$0x1]
    %v532 = vlaneseq
    %v533 = vshrl.u32 %v532, 7
    %v534 = vsub.s32 0, %v533
    %v535 = vrot.slane %v530, %v534
    %537 = vmatprep.subr.mxu0 0.0
    %538 = vmatpush1.msra.mxu0 %v498
    %539 = vmatprep.subr.mxu0 0.0
    %540 = vmatpush1.msra.mxu0 %v499
    %541 = vmatprep.subr.mxu0 0.0
    %542 = vmatpush1.msra.mxu0 %v500
    %543 = vmatprep.subr.mxu0 0.0
    %544 = vmatpush1.msra.mxu0 %v501
    %545 = vmatprep.subr.mxu0 0.0
    %546 = vmatpush1.msra.mxu0 %v502
    %547 = vmatprep.subr.mxu0 0.0
    %548 = vmatpush1.msra.mxu0 %v503
    %549 = vmatprep.subr.mxu0 0.0
    %550 = vmatpush1.msra.mxu0 %v504
    %551 = vmatprep.subr.mxu0 0.0
    %552 = vmatpush1.msra.mxu0 %v505
    %553 = vmatprep.subr.mxu0 0.0
    %554 = vmatpush1.msra.mxu0 %v506
    %555 = vmatprep.subr.mxu0 0.0
    %556 = vmatpush1.msra.mxu0 %v507
    %557 = vmatprep.subr.mxu0 0.0
    %558 = vmatpush1.msra.mxu0 %v508
    %559 = vmatprep.subr.mxu0 0.0
    %560 = vmatpush1.msra.mxu0 %v509
    %561 = vmatprep.subr.mxu0 0.0
    %562 = vmatpush1.msra.mxu0 %v510
    %563 = vmatprep.subr.mxu0 0.0
    %564 = vmatpush1.msra.mxu0 %v511
    %565 = vmatprep.subr.mxu0 0.0
    %566 = vmatpush1.msra.mxu0 %v512
    %567 = vmatprep.subr.mxu0 0.0
    %568 = vmatpush1.msra.mxu0 %v513
    %569 = vmatprep.subr.mxu0 0.0
    %570 = vmatpush1.msra.mxu0 %v514
    %571 = vmatprep.subr.mxu0 0.0
    %572 = vmatpush1.msra.mxu0 %v515
    %573 = vmatprep.subr.mxu0 0.0
    %574 = vmatpush1.msra.mxu0 %v516
    %575 = vmatprep.subr.mxu0 0.0
    %576 = vmatpush1.msra.mxu0 %v517
    %577 = vmatprep.subr.mxu0 0.0
    %578 = vmatpush1.msra.mxu0 %v518
    %579 = vmatprep.subr.mxu0 0.0
    %580 = vmatpush1.msra.mxu0 %v519
    %581 = vmatprep.subr.mxu0 0.0
    %582 = vmatpush1.msra.mxu0 %v520
    %583 = vmatprep.subr.mxu0 0.0
    %584 = vmatpush1.msra.mxu0 %v521
    %585 = vmatprep.subr.mxu0 0.0
    %586 = vmatpush1.msra.mxu0 %v522
    %587 = vmatprep.subr.mxu0 0.0
    %588 = vmatpush1.msra.mxu0 %v523
    %589 = vmatprep.subr.mxu0 0.0
    %590 = vmatpush1.msra.mxu0 %v524
    %591 = vmatprep.subr.mxu0 0.0
    %592 = vmatpush1.msra.mxu0 %v525
    %593 = vmatprep.subr.mxu0 0.0
    %594 = vmatpush1.msra.mxu0 %v526
    %595 = vmatprep.subr.mxu0 0.0
    %596 = vmatpush1.msra.mxu0 %v527
    %597 = vmatprep.subr.mxu0 0.0
    %598 = vmatpush1.msra.mxu0 %v528
    %599 = vmatprep.subr.mxu0 0.0
    %600 = vmatpush1.msra.mxu0 %v529
    %601 = vmatprep.mubr.f32.mxu0 %v497
    %602 = vmatmul.mubr.f32.gmra.mrb[0].mxu0 %v496
    %v603 = vpop.f32.mrb[0].mxu0
    %v604 = vadd.f32 %v535, %v603
    %v605 = vpop.f32.mrb[0].mxu0
    %606 = vdwg.mxu0
    %v607 = vtanh.pop %v604
    %608 = vst [vmem:[#allocation10] sm:$0xff] %v607
    // Predicated region
    $region46: #{tpu_custom_call.1} parent=1 // pred_check
      _
    $region47: #{tpu_custom_call.1} parent=1 // pred_check_branch
      %610 = sbr.rel (0) target = $region49
    $region48: #{tpu_custom_call.1} parent=1 // pred_region
      %s612 = ssub.s32 128, 128
      %613 = vsyncadd [#allocation4], %s612
      %s615 = sshll.u32 [#allocation10], 4
      %s616 = int_to_ptr.vmem [resolvable:$true] %s615
      %618 = dma.vmem_to_hbm [thread:$0]  %s616, 128, %s7, [#allocation4]
    $region49: #{tpu_custom_call.1} parent=1 // pred_fallthru
      _
    // Predicated region
    $region50: #{tpu_custom_call.1} parent=1 // pred_check
      _
    $region51: #{tpu_custom_call.1} parent=1 // pred_check_branch
      %620 = sbr.rel (0) target = $region53
    $region52: #{tpu_custom_call.1} parent=1 // pred_region
      %621 = dma.done [#allocation4], 128
    $region53: #{tpu_custom_call.1} parent=1 // pred_fallthru
      _
    %622 = vsyncpa [#allocation3], 1
    %623 = vsyncpa [#allocation6], 1
    %624 = vsyncpa [#allocation9], 1
    %625 = vsyncpa [#allocation4], 1

</llo_original>
